<compile_context>
chip_gen: v6e
topology: v6e:2x2x1
jax: 0.10.0
libtpu: 0.0.40
codegen_flags: <defaults>
</compile_context>

<pallas_src>
import math
from functools import partial

import jax
import jax.numpy as jnp
from jax import lax
from jax.experimental import pallas as pl
from jax.experimental.pallas import tpu as pltpu


# ----------------------------------------------------------------------------
# tiling helpers
# ----------------------------------------------------------------------------
def _tile_and_pad(dim, candidates):
    """Pick a tile from `candidates` (descending). Prefer an exact divisor; otherwise pad
    `dim` up to a multiple of the candidate that wastes the least. Returns (tile, padded_dim)."""
    for c in candidates:
        if c <= dim and dim % c == 0:
            return c, dim
    fits = [c for c in candidates if c <= dim]
    if not fits:                      # tiny dim: full-extent block is always legal
        return dim, dim
    best_c, best_pad = None, None
    for c in fits:
        padded = -(-dim // c) * c
        if best_pad is None or padded < best_pad:
            best_c, best_pad = c, padded
    return best_c, best_pad


def _pick_n_tile(N):
    """Lane-dense output tile for the projections (review: tn=512 / full N when it fits)."""
    if N <= 1024:
        return N                      # full-dim block -> single N tile, lane-dense stores
    for c in (1024, 640, 512, 384, 256, 128):
        if N % c == 0:
            return c
    return N                          # fallback: full-dim block (legal, costs more VMEM)


# ----------------------------------------------------------------------------
# Fused / tiled projection kernel:  o_i = x @ W_i (+ b_i)   for i in [0, n_out)
# single_k=True : grid (N/tn, M/tm), whole-K weight block resident, no accumulator scratch.
# single_k=False: grid (N/tn, M/tm, K/tk), K innermost, f32 VMEM accumulators.
# ----------------------------------------------------------------------------
def _fused_matmul_kernel(*refs, n_out, has_bias, single_k):
    x_ref = refs[0]
    pos = 1
    w_refs = refs[pos:pos + n_out]; pos += n_out
    if has_bias:
        b_refs = refs[pos:pos + n_out]; pos += n_out
    else:
        b_refs = None
    o_refs = refs[pos:pos + n_out]; pos += n_out
    acc_refs = None if single_k else refs[pos:pos + n_out]

    x = x_ref[...].astype(jnp.bfloat16)          # bf16 into the MXU, f32 accumulation

    if single_k:
        for i in range(n_out):
            r = jnp.dot(x, w_refs[i][...].astype(jnp.bfloat16),
                        preferred_element_type=jnp.float32)
            if has_bias:
                r = r + b_refs[i][...].astype(jnp.float32)
            o_refs[i][...] = r.astype(o_refs[i].dtype)
    else:
        k = pl.program_id(2)

        @pl.when(k == 0)
        def _init():
            for acc in acc_refs:
                acc[...] = jnp.zeros_like(acc)

        for i in range(n_out):
            acc_refs[i][...] += jnp.dot(x, w_refs[i][...].astype(jnp.bfloat16),
                                        preferred_element_type=jnp.float32)

        @pl.when(k == pl.num_programs(2) - 1)
        def _finalize():
            for i in range(n_out):
                r = acc_refs[i][...]
                if has_bias:
                    r = r + b_refs[i][...].astype(jnp.float32)
                o_refs[i][...] = r.astype(o_refs[i].dtype)


def fused_linear_pallas(x, weights, biases=None, out_dtype=jnp.bfloat16):
    """x: (M, K). weights: tuple of (K, N) arrays (shared N). biases: tuple of (1, N) or None.
    Returns a tuple of n_out arrays of shape (M, N), dtype out_dtype.
    Note: x may be f32 or bf16; bf16 activations halve the dominant HBM read traffic."""
    M, K = x.shape
    n_out = len(weights)
    N = weights[0].shape[1]
    has_bias = biases is not None

    tm, M_pad = _tile_and_pad(M, (256, 128, 64, 32, 16, 8))
    if M_pad != M:                    # row-padding guard (odd M can't blow the VMEM budget)
        x = jnp.pad(x, ((0, M_pad - M), (0, 0)))
    tn = _pick_n_tile(N)
    if K <= 2048:                     # whole-K block: reduction grid axis disappears
        tk, single_k = K, True
    else:
        tk = next((c for c in (1024, 512, 256, 128) if K % c == 0), K)
        single_k = (tk == K)
        # TODO(synk): zero-pad K for huge prime-ish reduction dims instead of a full-K block.

    n_tiles, m_tiles, k_tiles = N // tn, M_pad // tm, K // tk

    if single_k:
        grid = (n_tiles, m_tiles)                          # N outer -> weights resident over M sweep
        x_spec = pl.BlockSpec((tm, K), lambda j, i: (i, 0))
        w_spec = pl.BlockSpec((K, tn), lambda j, i: (0, j))
        b_spec = pl.BlockSpec((1, tn), lambda j, i: (0, j))
        o_spec = pl.BlockSpec((tm, tn), lambda j, i: (i, j))
        scratch = []
        semantics = ("parallel", "parallel")
    else:
        grid = (n_tiles, m_tiles, k_tiles)                 # K innermost (reduction)
        x_spec = pl.BlockSpec((tm, tk), lambda j, i, k: (i, k))
        w_spec = pl.BlockSpec((tk, tn), lambda j, i, k: (k, j))
        b_spec = pl.BlockSpec((1, tn), lambda j, i, k: (0, j))
        o_spec = pl.BlockSpec((tm, tn), lambda j, i, k: (i, j))
        scratch = [pltpu.VMEM((tm, tn), jnp.float32)] * n_out
        semantics = ("parallel", "parallel", "arbitrary")

    in_specs = [x_spec] + [w_spec] * n_out
    args = (x,) + tuple(weights)
    if has_bias:
        in_specs = in_specs + [b_spec] * n_out
        args = args + tuple(biases)

    outs = pl.pallas_call(
        partial(_fused_matmul_kernel, n_out=n_out, has_bias=has_bias, single_k=single_k),
        out_shape=tuple(jax.ShapeDtypeStruct((M_pad, N), out_dtype) for _ in range(n_out)),
        grid_spec=pltpu.PrefetchScalarGridSpec(
            num_scalar_prefetch=0,
            grid=grid,
            in_specs=in_specs,
            out_specs=tuple(o_spec for _ in range(n_out)),
            scratch_shapes=scratch,
        ),
        compiler_params=pltpu.CompilerParams(dimension_semantics=semantics),
    )(*args)

    if M_pad != M:
        outs = tuple(o[:M] for o in outs)
    return outs


# ----------------------------------------------------------------------------
# Flash-style multi-head attention kernel.
# q/k/v stay in (B, S, heads*dim_head) layout; head split is done in-kernel via static lane
# slices.  Online softmax over the KV grid axis; one lane-dense (tq, inner) acc/output store.
# Q is pre-scaled (softmax scale folded into the Q projection).
# ----------------------------------------------------------------------------
_NEG_INF = -1e30   # finite "minus infinity": avoids -inf - -inf NaNs in the online softmax


def _flash_attention_kernel(q_ref, k_ref, v_ref, o_ref, m_ref, l_ref, acc_ref,
                            *, heads, dim_head, tkv, skv_valid, kv_masked, exact_div):
    kv = pl.program_id(2)

    @pl.when(kv == 0)
    def _init():
        m_ref[...] = jnp.full(m_ref.shape, _NEG_INF, jnp.float32)
        l_ref[...] = jnp.zeros(l_ref.shape, jnp.float32)
        acc_ref[...] = jnp.zeros(acc_ref.shape, jnp.float32)

    q = q_ref[0].astype(jnp.bfloat16)       # (tq,  inner)  -- already carries softmax scale
    k = k_ref[0].astype(jnp.bfloat16)       # (tkv, inner)
    v = v_ref[0].astype(jnp.bfloat16)       # (tkv, inner)
    tq = q.shape[0]

    if kv_masked:                           # static flag: only when Skv had to be padded
        col = kv * tkv + lax.broadcasted_iota(jnp.int32, (1, tkv), 1)
        valid = col < skv_valid             # (1, tkv)

    contribs, alphas = [], []
    for h in range(heads):                  # static unroll over heads (in-kernel head split)
        sl = slice(h * dim_head, (h + 1) * dim_head)
        # QK^T without materializing k.T: contract the last dims of both operands.
        s = lax.dot_general(q[:, sl], k[:, sl], (((1,), (1,)), ((), ())),
                            preferred_element_type=jnp.float32)       # (tq, tkv) f32
        if kv_masked:
            s = jnp.where(valid, s, _NEG_INF)

        m_prev = m_ref[h]                                             # (tq, 1)
        m_new = jnp.maximum(m_prev, jnp.max(s, axis=-1, keepdims=True))
        alpha = jnp.exp(m_prev - m_new)                               # (tq, 1)
        p = jnp.exp(s - m_new)                                        # (tq, tkv)
        l_ref[h] = alpha * l_ref[h] + jnp.sum(p, axis=-1, keepdims=True)
        m_ref[h] = m_new

        contribs.append(jnp.dot(p.astype(jnp.bfloat16), v[:, sl],
                                preferred_element_type=jnp.float32))  # (tq, dim_head)
        alphas.append(jnp.broadcast_to(alpha, (tq, dim_head)))

    # ONE lane-dense (tq, heads*dim_head) accumulator update -- no per-head masked stores.
    contrib = jnp.concatenate(contribs, axis=-1)
    alpha_full = jnp.concatenate(alphas, axis=-1)
    acc_ref[...] = alpha_full * acc_ref[...] + contrib

    @pl.when(kv == pl.num_programs(2) - 1)
    def _finalize():
        if exact_div:
            invs = [1.0 / l_ref[h] for h in range(heads)]
        else:
            invs = [pl.reciprocal(l_ref[h], approx=True) for h in range(heads)]  # EUP slot
        inv_full = jnp.concatenate(
            [jnp.broadcast_to(invs[h], (tq, dim_head)) for h in range(heads)], axis=-1)
        o_ref[0] = (acc_ref[...] * inv_full).astype(o_ref.dtype)       # single lane-dense store


def attention_pallas(q, k, v, *, heads, dim_head, exact_div=False):
    """q: (B, Sq, inner), k/v: (B, Skv, inner) -> (B, Sq, inner) bf16.  Q must be pre-scaled."""
    B, Sq, inner = q.shape
    _, Skv, _ = k.shape

    # tq capped at 128 (safe on v5e MXU / v7x 64 MiB VMEM); tkv <= 512 keeps each K/V tile
    # <= ~1.3 MiB bf16 even at inner=1280, well inside every chip's default scoped VMEM.
    tq, Sq_pad = _tile_and_pad(Sq, (128, 64, 32, 16, 8))
    tkv, Skv_pad = _tile_and_pad(Skv, (512, 256, 128))
    if Sq_pad != Sq:
        q = jnp.pad(q, ((0, 0), (0, Sq_pad - Sq), (0, 0)))
    if Skv_pad != Skv:
        k = jnp.pad(k, ((0, 0), (0, Skv_pad - Skv), (0, 0)))
        v = jnp.pad(v, ((0, 0), (0, Skv_pad - Skv), (0, 0)))

    grid = (B, Sq_pad // tq, Skv_pad // tkv)

    out = pl.pallas_call(
        partial(_flash_attention_kernel, heads=heads, dim_head=dim_head, tkv=tkv,
                skv_valid=Skv, kv_masked=(Skv_pad != Skv), exact_div=exact_div),
        out_shape=jax.ShapeDtypeStruct((B, Sq_pad, inner), jnp.bfloat16),
        grid_spec=pltpu.PrefetchScalarGridSpec(
            num_scalar_prefetch=0,
            grid=grid,
            in_specs=[
                pl.BlockSpec((1, tq, inner), lambda b, i, kv: (b, i, 0)),
                pl.BlockSpec((1, tkv, inner), lambda b, i, kv: (b, kv, 0)),
                pl.BlockSpec((1, tkv, inner), lambda b, i, kv: (b, kv, 0)),
            ],
            out_specs=pl.BlockSpec((1, tq, inner), lambda b, i, kv: (b, i, 0)),
            scratch_shapes=[
                pltpu.VMEM((heads, tq, 1), jnp.float32),   # running max  m (per head)
                pltpu.VMEM((heads, tq, 1), jnp.float32),   # running sum  l (per head)
                pltpu.VMEM((tq, inner), jnp.float32),      # un-normalized output accumulator
            ],
        ),
        compiler_params=pltpu.CompilerParams(
            dimension_semantics=("parallel", "parallel", "arbitrary")),
    )(q, k, v)

    return out[:, :Sq, :] if Sq_pad != Sq else out


# ----------------------------------------------------------------------------
# CrossAttention module (JAX wrapper around the Pallas kernels)
# ----------------------------------------------------------------------------
class CrossAttentionPallas:
    def __init__(self, query_dim, cross_attention_dim=None, heads=8, dim_head=64,
                 bias=False, key=None, exact_softmax_div=False):
        self.heads = heads
        self.dim_head = dim_head
        self.scale = dim_head ** (-0.5)
        self.inner_dim = heads * dim_head
        self.query_dim = query_dim
        self.cross_attention_dim = (cross_attention_dim if cross_attention_dim is not None
                                    else query_dim)
        self.use_bias = bias
        self.exact_softmax_div = exact_softmax_div   # exact-div fallback for strict parity tests

        if key is None:
            key = jax.random.PRNGKey(0)
        kq, kk, kv, ko, kqb, kkb, kvb, kob = jax.random.split(key, 8)

        def init_w(k, in_f, out_f, fold=1.0):
            # kaiming-uniform-like init; stored transposed (in, out), bf16 for the MXU.
            bound = 1.0 / math.sqrt(in_f)
            w = jax.random.uniform(k, (in_f, out_f), jnp.float32, -bound, bound)
            return (w * fold).astype(jnp.bfloat16)

        # Softmax scale folded into the Q projection (weights AND bias):
        # scale*(xW_q+b_q)K^T == (x(scale*W_q)+scale*b_q)K^T  -> no in-kernel scale multiply.
        self.Wq_t = init_w(kq, self.query_dim, self.inner_dim, fold=self.scale)
        self.Wk_t = init_w(kk, self.cross_attention_dim, self.inner_dim)
        self.Wv_t = init_w(kv, self.cross_attention_dim, self.inner_dim)
        self.Wo_t = init_w(ko, self.inner_dim, self.query_dim)

        if bias:
            def init_b(k, in_f, out_f, fold=1.0):
                bound = 1.0 / math.sqrt(in_f)
                return jax.random.uniform(k, (1, out_f), jnp.float32, -bound, bound) * fold
            self.bq = init_b(kqb, self.query_dim, self.inner_dim, fold=self.scale)
            self.bk = init_b(kkb, self.cross_attention_dim, self.inner_dim)
            self.bv = init_b(kvb, self.cross_attention_dim, self.inner_dim)
        else:
            self.bq = self.bk = self.bv = None

        bound_o = 1.0 / math.sqrt(self.inner_dim)
        self.bo = jax.random.uniform(kob, (1, self.query_dim), jnp.float32, -bound_o, bound_o)

    def __call__(self, hidden_states, encoder_hidden_states=None):
        # TODO(synk): group_norm / added_kv_proj_dim / attention_mask / cross_frame_txtattn
        # (ctm_i / ctm_a motion-module) branches are outside the default config; not implemented.
        B, Sq, _ = hidden_states.shape
        x2 = hidden_states.reshape(B * Sq, self.query_dim)

        if encoder_hidden_states is None:
            # self-attention: Q, K and V fused into a single pass over hidden_states.
            Skv = Sq
            q2, k2, v2 = fused_linear_pallas(
                x2, (self.Wq_t, self.Wk_t, self.Wv_t),
                biases=(self.bq, self.bk, self.bv) if self.use_bias else None,
                out_dtype=jnp.bfloat16)
        else:
            Skv = encoder_hidden_states.shape[1]
            e2 = encoder_hidden_states.reshape(B * Skv, self.cross_attention_dim)
            (q2,) = fused_linear_pallas(
                x2, (self.Wq_t,),
                biases=(self.bq,) if self.use_bias else None, out_dtype=jnp.bfloat16)
            # K & V fused into one pass over the encoder activations (shared x-tile DMA).
            k2, v2 = fused_linear_pallas(
                e2, (self.Wk_t, self.Wv_t),
                biases=(self.bk, self.bv) if self.use_bias else None, out_dtype=jnp.bfloat16)

        q3 = q2.reshape(B, Sq, self.inner_dim)
        k3 = k2.reshape(B, Skv, self.inner_dim)
        v3 = v2.reshape(B, Skv, self.inner_dim)

        o3 = attention_pallas(q3, k3, v3, heads=self.heads, dim_head=self.dim_head,
                              exact_div=self.exact_softmax_div)

        # output projection (bias=True); to_out[1] dropout is identity at eval.
        # TODO(synk): emit bf16 here when the surrounding model runs in bf16 (halves HBM bytes).
        (out2,) = fused_linear_pallas(
            o3.reshape(B * Sq, self.inner_dim), (self.Wo_t,), biases=(self.bo,),
            out_dtype=jnp.float32)
        return out2.reshape(B, Sq, self.query_dim)


# ----------------------------------------------------------------------------
# Pure-JAX reference (mirrors the kernel's bf16-MXU / f32-softmax precision choices).
# The softmax scale is already folded into Wq_t / bq, so no explicit `* scale` here —
# mathematically identical to the PyTorch module.
# ----------------------------------------------------------------------------
def reference_forward(mod, hidden_states, encoder_hidden_states=None):
    bf16, f32 = jnp.bfloat16, jnp.float32
    B, Sq, _ = hidden_states.shape
    enc = hidden_states if encoder_hidden_states is None else encoder_hidden_states
    Skv = enc.shape[1]
    H, d = mod.heads, mod.dim_head

    def proj(x2, w_t, b=None, out_dtype=bf16):
        y = jnp.dot(x2.astype(bf16), w_t.astype(bf16), preferred_element_type=f32)
        if b is not None:
            y = y + b
        return y.astype(out_dtype)

    q = proj(hidden_states.reshape(-1, mod.query_dim), mod.Wq_t,
             mod.bq if mod.use_bias else None).reshape(B, Sq, mod.inner_dim)
    k = proj(enc.reshape(-1, mod.cross_attention_dim), mod.Wk_t,
             mod.bk if mod.use_bias else None).reshape(B, Skv, mod.inner_dim)
    v = proj(enc.reshape(-1, mod.cross_attention_dim), mod.Wv_t,
             mod.bv if mod.use_bias else None).reshape(B, Skv, mod.inner_dim)

    qh = q.reshape(B, Sq, H, d).transpose(0, 2, 1, 3)
    kh = k.reshape(B, Skv, H, d).transpose(0, 2, 1, 3)
    vh = v.reshape(B, Skv, H, d).transpose(0, 2, 1, 3)

    s = jnp.einsum("bhqd,bhkd->bhqk", qh, kh, preferred_element_type=f32)
    p = jax.nn.softmax(s, axis=-1)
    oh = jnp.einsum("bhqk,bhkd->bhqd", p.astype(bf16), vh, preferred_element_type=f32)
    o = oh.transpose(0, 2, 1, 3).reshape(B, Sq, mod.inner_dim).astype(bf16)

    out = proj(o.reshape(-1, mod.inner_dim), mod.Wo_t, mod.bo, out_dtype=f32)
    return out.reshape(B, Sq, mod.query_dim)


if __name__ == "__main__":
    key = jax.random.PRNGKey(0)
    k_param, k_x, k_enc = jax.random.split(key, 3)

    B, Sq, Skv = 2, 16, 8
    query_dim, cross_dim = 32, 32
    heads, dim_head = 4, 8

    mod = CrossAttentionPallas(query_dim=query_dim, cross_attention_dim=cross_dim,
                               heads=heads, dim_head=dim_head, key=k_param)

    hidden_states = jax.random.normal(k_x, (B, Sq, query_dim), jnp.float32)
    encoder_hidden_states = jax.random.normal(k_enc, (B, Skv, cross_dim), jnp.float32)

    # cross-attention path
    out = jax.block_until_ready(mod(hidden_states, encoder_hidden_states))
    ref = jax.block_until_ready(reference_forward(mod, hidden_states, encoder_hidden_states))
    assert out.shape == (B, Sq, query_dim)
    max_diff = float(jnp.max(jnp.abs(out - ref)))
    assert jnp.allclose(out, ref, atol=1e-2, rtol=1e-2), f"cross-attn mismatch: {max_diff}"

    # self-attention path (encoder_hidden_states=None -> fused single-pass QKV projection)
    out_s = jax.block_until_ready(mod(hidden_states))
    ref_s = jax.block_until_ready(reference_forward(mod, hidden_states))
    max_diff_s = float(jnp.max(jnp.abs(out_s - ref_s)))
    assert jnp.allclose(out_s, ref_s, atol=1e-2, rtol=1e-2), f"self-attn mismatch: {max_diff_s}"

    print("KERNEL_OK")
</pallas_src>

<mosaic_0001>
module attributes {stable_mosaic.version = 11 : i64} {
  func.func @_fused_matmul_kernel(%arg0: i32, %arg1: i32, %arg2: memref<32x32xf32, #tpu.memory_space<vmem>>, %arg3: memref<32x32xbf16, #tpu.memory_space<vmem>>, %arg4: memref<32x32xbf16, #tpu.memory_space<vmem>>) attributes {dimension_semantics = [#tpu.dimension_semantics<parallel>, #tpu.dimension_semantics<parallel>], iteration_bounds = array<i64: 1, 1>, scalar_prefetch = 0 : i64, scratch_operands = 0 : i64, tpu.core_type = #tpu.core_type<tc>, window_params = [{transform_indices = @transform_0, window_bounds = array<i64: 32, 32>}, {transform_indices = @transform_1, window_bounds = array<i64: 32, 32>}, {transform_indices = @transform_2, window_bounds = array<i64: 32, 32>}]} {
    %c0 = arith.constant 0 : index
    %c0_0 = arith.constant 0 : index
    %0 = vector.load %arg2[%c0, %c0_0] : memref<32x32xf32, #tpu.memory_space<vmem>>, vector<32x32xf32>
    %1 = arith.truncf %0 : vector<32x32xf32> to vector<32x32xbf16>
    %c0_1 = arith.constant 0 : index
    %c0_2 = arith.constant 0 : index
    %2 = vector.load %arg3[%c0_1, %c0_2] : memref<32x32xbf16, #tpu.memory_space<vmem>>, vector<32x32xbf16>
    %cst = arith.constant dense<0.000000e+00> : vector<32x32xf32>
    %3 = tpu.matmul %1, %2, %cst {dimension_numbers = #tpu.dot_dimension_numbers<[1], [0], [0], [1], [0, 0, 1, 1], [], []>} : vector<32x32xbf16>, vector<32x32xbf16>, vector<32x32xf32> -> vector<32x32xf32>
    %4 = arith.truncf %3 : vector<32x32xf32> to vector<32x32xbf16>
    %c0_3 = arith.constant 0 : index
    %c0_4 = arith.constant 0 : index
    %5 = vector.load %arg4[%c0_3, %c0_4] : memref<32x32xbf16, #tpu.memory_space<vmem>>, vector<32x32xbf16>
    tpu.vector_store %arg4[%c0_3, %c0_4], %4 {strides = array<i32>} : memref<32x32xbf16, #tpu.memory_space<vmem>>, vector<32x32xbf16>,
    return
  }
  func.func @transform_0(%arg0: i32, %arg1: i32) -> (i32, i32) {
    %c0_i32 = arith.constant 0 : i32
    %c0_i32_0 = arith.constant 0 : i32
    return %arg1, %c0_i32 : i32, i32
  }
  func.func @transform_1(%arg0: i32, %arg1: i32) -> (i32, i32) {
    %c0_i32 = arith.constant 0 : i32
    %c0_i32_0 = arith.constant 0 : i32
    return %c0_i32, %arg0 : i32, i32
  }
  func.func @transform_2(%arg0: i32, %arg1: i32) -> (i32, i32) {
    %c0_i32 = arith.constant 0 : i32
    return %arg1, %arg0 : i32, i32
  }
}

</mosaic_0001>

<llo_original>
// kernel: tpu_custom_call.1
$region0: #{tpu_custom_call.1}
  #allocation0 [shape = 'u32[]', space=smem, size = 0x4, offset = 0x4, fixed_abs, tag = 'smem constant byte address 0x4 - core index']
  #allocation1 [shape = 'u32[144,128]{1,0:T(1,128)}', space=vmem, size = 0x12000, scoped, tag = 'internal scratch']
  %s0 = inlined_call_operand.hbm [shape: f32[32,32], index: 0, kind: input, shape index: {}]
  %s1 = inlined_call_operand.hbm [shape: bf16[32,32], index: 1, kind: input, shape index: {}]
  %s2 = inlined_call_operand.hbm [shape: bf16[32,32], index: 2, kind: output, shape index: {}]
  %s3 = sld [smem:[#allocation0]]
  $region26: #{tpu_custom_call.1} parent=0
    _
  %s5 = ssub.s32 1, %s3
  %s6 = scalar_select 0, %s5, %s3
  $region1: #{tpu_custom_call.1} parent=0
    #allocation2 [shape = 'u8[16384]{0}', space=vmem, size = 0x4000, scoped, tag = 'input window, operand 0, single buffered']
    #allocation3 [shape = 's32[1]{0}', space=sflag, size = 0x4, scoped, tag = 'scoped memory for tpu_custom_call.1']
    #allocation4 [shape = 's32[1]{0}', space=sflag, size = 0x4, scoped, tag = 'scoped memory for tpu_custom_call.1']
    #allocation5 [shape = 'u8[8192]{0}', space=vmem, size = 0x2000, scoped, tag = 'input window, operand 1, single buffered']
    #allocation6 [shape = 's32[1]{0}', space=sflag, size = 0x4, scoped, tag = 'scoped memory for tpu_custom_call.1']
    #allocation7 [shape = 'u8[8192]{0}', space=vmem, size = 0x2000, scoped, tag = 'output window, operand 0, single buffered']
    %7 = vsyncpa [#allocation3], 0
    %8 = vsyncpa [#allocation6], 0
    %9 = vsyncpa [#allocation4], 0
    // Predicated region
    $region2: #{tpu_custom_call.1} parent=1 // pred_check
      _
    $region3: #{tpu_custom_call.1} parent=1 // pred_check_branch
      %11 = sbr.rel (0) target = $region5
    $region4: #{tpu_custom_call.1} parent=1 // pred_region
      %s13 = ssub.s32 512, 512
      %14 = vsyncadd [#allocation3], %s13
      %s15 = sshll.u32 [#allocation2], 4
      %s16 = int_to_ptr.vmem [resolvable:$true] %s15
      %21 = dma.hbm_to_vmem [thread:$0]  %s0, 512, %s16, [#allocation3], 128, 128, 8
    $region5: #{tpu_custom_call.1} parent=1 // pred_fallthru
      _
    // Predicated region
    $region6: #{tpu_custom_call.1} parent=1 // pred_check
      _
    $region7: #{tpu_custom_call.1} parent=1 // pred_check_branch
      %23 = sbr.rel (0) target = $region9
    $region8: #{tpu_custom_call.1} parent=1 // pred_region
      %s25 = ssub.s32 256, 256
      %26 = vsyncadd [#allocation6], %s25
      %s27 = sshll.u32 [#allocation5], 4
      %s28 = int_to_ptr.vmem [resolvable:$true] %s27
      %33 = dma.hbm_to_vmem [thread:$0]  %s1, 256, %s28, [#allocation6], 64, 64, 4
    $region9: #{tpu_custom_call.1} parent=1 // pred_fallthru
      _
    // Predicated region
    $region10: #{tpu_custom_call.1} parent=1 // pred_check
      _
    $region11: #{tpu_custom_call.1} parent=1 // pred_check_branch
      %35 = sbr.rel (0) target = $region13
    $region12: #{tpu_custom_call.1} parent=1 // pred_region
      %36 = dma.done [#allocation3], 512
    $region13: #{tpu_custom_call.1} parent=1 // pred_fallthru
      _
    // Predicated region
    $region14: #{tpu_custom_call.1} parent=1 // pred_check
      _
    $region15: #{tpu_custom_call.1} parent=1 // pred_check_branch
      %38 = sbr.rel (0) target = $region17
    $region16: #{tpu_custom_call.1} parent=1 // pred_region
      %39 = dma.done [#allocation6], 256
    $region17: #{tpu_custom_call.1} parent=1 // pred_fallthru
      _
    %v41 = vld [vmem:[#allocation2] sm:$0xff]
    %v42 = vld [vmem:[#allocation2 + $0x8] sm:$0xff]
    %v43 = vld [vmem:[#allocation2 + $0x10] sm:$0xff]
    %v44 = vld [vmem:[#allocation2 + $0x18] sm:$0xff]
    %v45 = vpack.c.bf16 %v42, %v41
    %v46 = vpack.c.bf16 %v44, %v43
    %v47 = vld [vmem:[#allocation5] sm:$0xf]
    %v48 = vld [vmem:[#allocation5 + $0x4] sm:$0xf]
    %v49 = vld [vmem:[#allocation5 + $0x8] sm:$0xf]
    %v50 = vld [vmem:[#allocation5 + $0xc] sm:$0xf]
    %v55 = vunpack.c.l.b16 %v47
    %v56 = vunpack.c.l.b16 %v48
    %v57 = vunpack.c.l.b16 %v49
    %v58 = vunpack.c.l.b16 %v50
    %v59 = vpack.c.b16 %v56, %v55
    %v60 = vpack.c.b16 %v58, %v57
    %vm63 = vcmask 261120
    %v65 = vsel %vm63, %v45, 0
    %v68 = vsel %vm63, %v46, 0
    %70 = vmatprep.subr.bf16.mxu0 0
    %71 = vmatpush1.bf16.msra.mxu0 0
    %72 = vmatprep.subr.bf16.mxu0 0
    %73 = vmatpush1.bf16.msra.mxu0 0
    %74 = vmatprep.subr.bf16.mxu0 0
    %75 = vmatpush1.bf16.msra.mxu0 0
    %76 = vmatprep.subr.bf16.mxu0 0
    %77 = vmatpush1.bf16.msra.mxu0 0
    %78 = vmatprep.subr.bf16.mxu0 0
    %79 = vmatpush1.bf16.msra.mxu0 0
    %80 = vmatprep.subr.bf16.mxu0 0
    %81 = vmatpush1.bf16.msra.mxu0 0
    %82 = vmatprep.subr.bf16.mxu0 0
    %83 = vmatpush1.bf16.msra.mxu0 %v60
    %84 = vmatprep.subr.bf16.mxu0 0
    %85 = vmatpush1.bf16.msra.mxu0 %v59
    %86 = vmatprep.subr.bf16.mxu0 0
    %87 = vmatpush2.bf16.msra.mxu0 0
    %88 = vmatprep.subr.bf16.mxu0 0
    %89 = vmatpush2.bf16.msra.mxu0 0
    %90 = vmatprep.subr.bf16.mxu0 0
    %91 = vmatpush2.bf16.msra.mxu0 0
    %92 = vmatprep.subr.bf16.mxu0 0
    %93 = vmatpush2.bf16.msra.mxu0 0
    %94 = vmatprep.subr.bf16.mxu0 0
    %95 = vmatpush2.bf16.msra.mxu0 0
    %96 = vmatprep.subr.bf16.mxu0 0
    %97 = vmatpush2.bf16.msra.mxu0 0
    %98 = vmatprep.subr.bf16.mxu0 0
    %99 = vmatpush2.bf16.msra.mxu0 0
    %100 = vmatprep.subr.bf16.mxu0 0
    %101 = vmatpush2.bf16.msra.mxu0 0
    %102 = vmatprep.mubr.bf16.mxu0 0
    %103 = vmatmul.mubr.bf16.gmra.mxu0 %v65
    %v104 = vpop.f32.mrf.mxu0
    %v105 = vadd.f32 0.0, %v104
    %v106 = vpop.f32.mrf.mxu0
    %v107 = vpop.f32.mrf.mxu0
    %v108 = vadd.f32 0.0, %v107
    %v109 = vpop.f32.mrf.mxu0
    %110 = vmatprep.mubr.bf16.mxu0 0
    %111 = vmatmul.mubr.bf16.gmra.mxu0 %v68
    %v112 = vpop.f32.mrf.mxu0
    %v113 = vadd.f32 0.0, %v112
    %v114 = vpop.f32.mrf.mxu0
    %v115 = vpop.f32.mrf.mxu0
    %v116 = vadd.f32 0.0, %v115
    %v117 = vpop.f32.mrf.mxu0
    %118 = vdwg.mxu0
    %v119 = vpack.c.bf16 %v108, %v105
    %v120 = vpack.c.bf16 %v116, %v113
    %v123 = vunpack.c.l.b16 %v119
    %v124 = vunpack.c.h.b16 %v119
    %v125 = vunpack.c.l.b16 %v120
    %v126 = vunpack.c.h.b16 %v120
    %v127 = vpack.c.b16 %v123, %v123
    %v128 = vpack.c.b16 %v124, %v124
    %v129 = vpack.c.b16 %v125, %v125
    %v130 = vpack.c.b16 %v126, %v126
    %vm135 = vcmask 257024
    %136 = vst.msk [vmem:[#allocation7] sm:$0xf] %vm135, %v127
    %137 = vst.msk [vmem:[#allocation7 + $0x4] sm:$0xf] %vm135, %v128
    %138 = vst.msk [vmem:[#allocation7 + $0x8] sm:$0xf] %vm135, %v129
    %139 = vst.msk [vmem:[#allocation7 + $0xc] sm:$0xf] %vm135, %v130
    // Predicated region
    $region18: #{tpu_custom_call.1} parent=1 // pred_check
      _
    $region19: #{tpu_custom_call.1} parent=1 // pred_check_branch
      %141 = sbr.rel (0) target = $region21
    $region20: #{tpu_custom_call.1} parent=1 // pred_region
      %s143 = ssub.s32 256, 256
      %144 = vsyncadd [#allocation4], %s143
      %s145 = sshll.u32 [#allocation7], 4
      %s146 = int_to_ptr.vmem [resolvable:$true] %s145
      %151 = dma.vmem_to_hbm [thread:$0]  %s146, 256, %s2, [#allocation4], 64, 64, 4
    $region21: #{tpu_custom_call.1} parent=1 // pred_fallthru
      _
    // Predicated region
    $region22: #{tpu_custom_call.1} parent=1 // pred_check
      _
    $region23: #{tpu_custom_call.1} parent=1 // pred_check_branch
      %153 = sbr.rel (0) target = $region25
    $region24: #{tpu_custom_call.1} parent=1 // pred_region
      %154 = dma.done [#allocation4], 256
    $region25: #{tpu_custom_call.1} parent=1 // pred_fallthru
      _
    %155 = vsyncpa [#allocation3], 1
    %156 = vsyncpa [#allocation6], 1
    %157 = vsyncpa [#allocation4], 1

</llo_original>
